<compile_context>
chip_gen: v7x
topology: tpu7x:2x2x1
jax: 0.10.0
libtpu: 0.0.40
codegen_flags: <defaults>
</compile_context>

<pallas_src>
import jax
import jax.numpy as jnp
from jax.experimental import pallas as pl
from jax.experimental.pallas import tpu as pltpu


def _round_up(x: int, m: int) -> int:
    return ((x + m - 1) // m) * m


def _sublane_multiple(dtype) -> int:
    # Sub-32-bit dtypes pack along sublanes: 8 rows (f32), 16 (bf16), 32 (int8/fp8).
    return {4: 8, 2: 16, 1: 32}.get(jnp.dtype(dtype).itemsize, 8)


def _pick_tile(dim: int, pref: int, align: int) -> int:
    """Largest tile <= pref (multiple of `align`); prefers a divisor of the
    aligned dim so padding of the operand can be skipped entirely."""
    d = _round_up(dim, align)
    if d <= pref:
        return d
    thresh = max(align, pref // 4)
    for cand in range(pref, thresh - 1, -align):
        if d % cand == 0:
            return cand
    return pref


# --------------------------------------------------------------------------- kernels
def _linear_kernel_f32(x_ref, w_ref, b_ref, o_ref):
    # f32 output: accumulate directly into the resident output tile (no scratch).
    # x_ref: (tm, tk), w_ref: (tk, tn), b_ref: (1, tn) f32, o_ref: (tm, tn) f32.
    k = pl.program_id(2)
    prod = jnp.dot(x_ref[...], w_ref[...], preferred_element_type=jnp.float32)

    @pl.when(k == 0)
    def _():
        # Fold bias into the init; padded-K contributions are zero.
        o_ref[...] = b_ref[...] + prod

    @pl.when(k > 0)
    def _():
        o_ref[...] += prod


def _linear_kernel_acc(x_ref, w_ref, b_ref, o_ref, acc_ref):
    # Non-f32 output: keep an f32 VMEM accumulator, cast once in the epilogue.
    k = pl.program_id(2)

    @pl.when(k == 0)
    def _():
        acc_ref[...] = jnp.broadcast_to(b_ref[...], acc_ref.shape)

    acc_ref[...] += jnp.dot(x_ref[...], w_ref[...], preferred_element_type=jnp.float32)

    @pl.when(k == pl.num_programs(2) - 1)
    def _():
        o_ref[...] = acc_ref[...].astype(o_ref.dtype)


def _linear_small_kernel(x_ref, w_ref, b_ref, o_ref):
    # Tiny-problem fast path: one block, one MXU call, bias add, store.
    o_ref[...] = (
        jnp.dot(x_ref[...], w_ref[...], preferred_element_type=jnp.float32)
        + b_ref[...]
    ).astype(o_ref.dtype)


# --------------------------------------------------------------------------- wrapper
def custom_linear(
    x: jax.Array,
    weight: jax.Array,
    bias: jax.Array,
    *,
    tm: int = 512,
    tn: int = 1024,
    tk: int = 1024,
    compute_dtype=None,   # e.g. jnp.bfloat16 on v6e/v7x (accumulation stays f32)
) -> jax.Array:
    """y = x @ weight.T + bias   (PyTorch F.linear semantics)."""
    orig_shape = x.shape
    out_features, in_features = weight.shape
    out_dtype = x.dtype

    x2 = x.reshape(-1, in_features)
    M, K, N = x2.shape[0], in_features, out_features

    cdtype = jnp.dtype(compute_dtype) if compute_dtype is not None else jnp.dtype(x.dtype)
    in_itemsize = cdtype.itemsize
    out_itemsize = jnp.dtype(out_dtype).itemsize

    # One-time layout plumbing: lane-major contraction for the MXU.  Under jit with
    # a static weight this transpose/cast is hoisted; repeat callers can also cache
    # weight.T themselves and pass it in pre-transposed form.
    w_t = weight.T.astype(cdtype)                       # (K, N)
    x2c = x2.astype(cdtype)
    b_f32 = bias.astype(jnp.float32).reshape(1, N)

    # ---------------- tiny-problem fast path: single block, no padding, no pipeline
    if (
        M <= 1024 and N <= 2048 and K <= 2048
        and (M * K + K * N + M * N + N) * 4 <= (2 << 20)
    ):
        out = pl.pallas_call(
            _linear_small_kernel,
            out_shape=jax.ShapeDtypeStruct((M, N), out_dtype),
            grid=(1,),
            in_specs=[
                pl.BlockSpec((M, K), lambda i: (0, 0)),
                pl.BlockSpec((K, N), lambda i: (0, 0)),
                pl.BlockSpec((1, N), lambda i: (0, 0)),
            ],
            out_specs=pl.BlockSpec((M, N), lambda i: (0, 0)),
        )(x2c, w_t, b_f32)
        return out.reshape(*orig_shape[:-1], N)

    # ---------------- tiled, pipelined path
    sub = _sublane_multiple(cdtype)
    tm = _pick_tile(M, min(tm, 512), sub)
    tn = _pick_tile(N, tn, 128)
    tk = _pick_tile(K, tk, 128)

    Mp, Np, Kp = _round_up(M, tm), _round_up(N, tn), _round_up(K, tk)

    # v7x has 2 TensorCores sharing the 'parallel' grid axes: make sure there are
    # at least 2 parallel blocks when the problem is skinny in M.
    if (Mp // tm) * (Np // tn) == 1 and tn >= 256 and tn % 256 == 0:
        tn //= 2

    xp = x2c if (Mp == M and Kp == K) else jnp.pad(x2c, ((0, Mp - M), (0, Kp - K)))
    wp = w_t if (Kp == K and Np == N) else jnp.pad(w_t, ((0, Kp - K), (0, Np - N)))
    bp = b_f32 if Np == N else jnp.pad(b_f32, ((0, 0), (0, Np - N)))

    grid = (Mp // tm, Np // tn, Kp // tk)

    use_f32_inplace = out_dtype == jnp.float32
    kernel = _linear_kernel_f32 if use_f32_inplace else _linear_kernel_acc
    scratch = [] if use_f32_inplace else [pltpu.VMEM((tm, tn), jnp.float32)]

    # Double-buffered working set (+ f32 acc scratch when output isn't f32).
    vmem_bytes = (
        2 * (tm * tk + tk * tn) * in_itemsize   # x tile + W^T tile, double-buffered
        + 2 * 8 * tn * 4                        # bias tile (sublane-padded)
        + 2 * tm * tn * out_itemsize            # output tile
    )
    if not use_f32_inplace:
        vmem_bytes += tm * tn * 4
    # Headroom for compiler-internal scratch; cap below v7x's 64 MiB physical VMEM.
    vmem_limit = min(max(int(1.5 * vmem_bytes), 32 << 20), 48 << 20)

    cost = pl.CostEstimate(
        flops=2 * Mp * Np * Kp,
        transcendentals=0,
        bytes_accessed=(
            Mp * Kp * (Np // tn) * in_itemsize      # x re-read per N block
            + Kp * Np * (Mp // tm) * in_itemsize    # W^T re-read per M block
            + Np * 4
            + Mp * Np * out_itemsize
        ),
    )

    out = pl.pallas_call(
        kernel,
        out_shape=jax.ShapeDtypeStruct((Mp, Np), out_dtype),
        grid_spec=pltpu.PrefetchScalarGridSpec(
            num_scalar_prefetch=0,
            grid=grid,
            in_specs=[
                pl.BlockSpec((tm, tk), lambda i, j, k: (i, k)),   # x tile
                pl.BlockSpec((tk, tn), lambda i, j, k: (k, j)),   # W^T tile
                pl.BlockSpec((1, tn), lambda i, j, k: (0, j)),    # bias (k-invariant)
            ],
            out_specs=pl.BlockSpec((tm, tn), lambda i, j, k: (i, j)),
            scratch_shapes=scratch,
        ),
        compiler_params=pltpu.CompilerParams(
            dimension_semantics=("parallel", "parallel", "arbitrary"),
            vmem_limit_bytes=vmem_limit,
        ),
        cost_estimate=cost,
    )(xp, wp, bp)

    out = out[:M, :N]
    return out.reshape(*orig_shape[:-1], N)


if __name__ == "__main__":
    key = jax.random.PRNGKey(0)
    k_x, k_w, k_b, k_x2 = jax.random.split(key, 4)

    # Small shape matching the Opacus test module (exercises the single-block path).
    batch, in_features, out_features = 8, 32, 16
    x = jax.random.normal(k_x, (batch, in_features), dtype=jnp.float32)
    weight = jax.random.normal(k_w, (out_features, in_features), dtype=jnp.float32)
    bias = jax.random.normal(k_b, (out_features,), dtype=jnp.float32)

    y = jax.block_until_ready(custom_linear(x, weight, bias))
    y_ref = x @ weight.T + bias
    assert y.shape == (batch, out_features)
    assert jnp.allclose(y, y_ref, atol=1e-5, rtol=1e-5), "small-path mismatch"

    # Larger, unaligned shape exercising the tiled / pipelined path (with padding).
    M2, K2, N2 = 1030, 520, 260
    x_big = jax.random.normal(k_x2, (M2, K2), dtype=jnp.float32)
    w_big = jax.random.normal(k_w, (N2, K2), dtype=jnp.float32)
    b_big = jax.random.normal(k_b, (N2,), dtype=jnp.float32)

    y_big = jax.block_until_ready(custom_linear(x_big, w_big, b_big))
    y_big_ref = jnp.dot(x_big, w_big.T, precision=jax.lax.Precision.HIGHEST) + b_big
    assert y_big.shape == (M2, N2)
    assert jnp.allclose(y_big, y_big_ref, atol=1e-2, rtol=1e-4), "tiled-path mismatch"

    print("KERNEL_OK")
</pallas_src>

<mosaic_0001>
module attributes {stable_mosaic.version = 11 : i64} {
  func.func @_linear_small_kernel(%arg0: i32, %arg1: memref<8x32xf32, #tpu.memory_space<vmem>>, %arg2: memref<32x16xf32, #tpu.memory_space<vmem>>, %arg3: memref<1x16xf32, #tpu.memory_space<vmem>>, %arg4: memref<8x16xf32, #tpu.memory_space<vmem>>) attributes {dimension_semantics = [#tpu.dimension_semantics<arbitrary>], iteration_bounds = array<i64: 1>, scalar_prefetch = 0 : i64, scratch_operands = 0 : i64, tpu.core_type = #tpu.core_type<tc>, window_params = [{pipeline_mode = #tpu.pipeline_mode<synchronous>, transform_indices = @transform_0, window_bounds = array<i64: 8, 32>}, {pipeline_mode = #tpu.pipeline_mode<synchronous>, transform_indices = @transform_1, window_bounds = array<i64: 32, 16>}, {pipeline_mode = #tpu.pipeline_mode<synchronous>, transform_indices = @transform_2, window_bounds = array<i64: 1, 16>}, {pipeline_mode = #tpu.pipeline_mode<synchronous>, transform_indices = @transform_3, window_bounds = array<i64: 8, 16>}]} {
    %c0 = arith.constant 0 : index
    %c0_0 = arith.constant 0 : index
    %0 = vector.load %arg1[%c0, %c0_0] : memref<8x32xf32, #tpu.memory_space<vmem>>, vector<8x32xf32>
    %c0_1 = arith.constant 0 : index
    %c0_2 = arith.constant 0 : index
    %1 = vector.load %arg2[%c0_1, %c0_2] : memref<32x16xf32, #tpu.memory_space<vmem>>, vector<32x16xf32>
    %cst = arith.constant dense<0.000000e+00> : vector<8x16xf32>
    %2 = tpu.matmul %0, %1, %cst {dimension_numbers = #tpu.dot_dimension_numbers<[1], [0], [0], [1], [0, 0, 1, 1], [], []>} : vector<8x32xf32>, vector<32x16xf32>, vector<8x16xf32> -> vector<8x16xf32>
    %c0_3 = arith.constant 0 : index
    %c0_4 = arith.constant 0 : index
    %3 = vector.load %arg3[%c0_3, %c0_4] : memref<1x16xf32, #tpu.memory_space<vmem>>, vector<1x16xf32>
    %4 = vector.broadcast %3 : vector<1x16xf32> to vector<8x16xf32>
    %5 = arith.addf %2, %4 : vector<8x16xf32>
    %c0_5 = arith.constant 0 : index
    %c0_6 = arith.constant 0 : index
    %6 = vector.load %arg4[%c0_5, %c0_6] : memref<8x16xf32, #tpu.memory_space<vmem>>, vector<8x16xf32>
    tpu.vector_store %arg4[%c0_5, %c0_6], %5 {strides = array<i32>} : memref<8x16xf32, #tpu.memory_space<vmem>>, vector<8x16xf32>,
    return
  }
  func.func @transform_0(%arg0: i32) -> (i32, i32) {
    %c0_i32 = arith.constant 0 : i32
    %c0_i32_0 = arith.constant 0 : i32
    %c0_i32_1 = arith.constant 0 : i32
    return %c0_i32, %c0_i32_0 : i32, i32
  }
  func.func @transform_1(%arg0: i32) -> (i32, i32) {
    %c0_i32 = arith.constant 0 : i32
    %c0_i32_0 = arith.constant 0 : i32
    %c0_i32_1 = arith.constant 0 : i32
    return %c0_i32, %c0_i32_0 : i32, i32
  }
  func.func @transform_2(%arg0: i32) -> (i32, i32) {
    %c0_i32 = arith.constant 0 : i32
    %c0_i32_0 = arith.constant 0 : i32
    %c0_i32_1 = arith.constant 0 : i32
    return %c0_i32, %c0_i32_0 : i32, i32
  }
  func.func @transform_3(%arg0: i32) -> (i32, i32) {
    %c0_i32 = arith.constant 0 : i32
    %c0_i32_0 = arith.constant 0 : i32
    %c0_i32_1 = arith.constant 0 : i32
    return %c0_i32, %c0_i32_0 : i32, i32
  }
}

</mosaic_0001>

<llo_original>
// kernel: tpu_custom_call.1
$region0: #{tpu_custom_call.1}
  #allocation0 [shape = 'u32[]', space=smem, size = 0x4, offset = 0x4, fixed_abs, tag = 'smem constant byte address 0x4 - core index']
  #allocation1 [shape = 'u32[144,128]{1,0:T(1,128)}', space=vmem, size = 0x12000, scoped, tag = 'internal scratch']
  %s0 = inlined_call_operand.vmem [shape: f32[8,32], index: 0, kind: input, shape index: {}]
  %s1 = inlined_call_operand.vmem [shape: f32[32,16], index: 1, kind: input, shape index: {}]
  %s2 = inlined_call_operand.vmem [shape: f32[1,16], index: 2, kind: input, shape index: {}]
  %s3 = inlined_call_operand.hbm [shape: f32[8,16], index: 3, kind: output, shape index: {}]
  %s4 = sld [smem:[#allocation0]]
  $region22: #{tpu_custom_call.1} parent=0
    _
  %s6 = ssub.s32 1, %s4
  %s7 = scalar_select 0, %s6, %s4
  $region1: #{tpu_custom_call.1} parent=0
    #allocation2 [shape = 'u8[4096]{0}', space=vmem, size = 0x1000, scoped, tag = 'output window, operand 0, single buffered']
    #allocation3 [shape = 's32[1]{0}', space=sflag, size = 0x4, scoped, tag = 'scoped memory for tpu_custom_call.1']
    %8 = vsyncpa [#allocation3], 0
    // Predicated region
    $region2: #{tpu_custom_call.1} parent=1 // pred_check
      _
    $region3: #{tpu_custom_call.1} parent=1 // pred_check_branch
      %10 = sbr.rel (0) target = $region5
    $region4: #{tpu_custom_call.1} parent=1 // pred_region
      _
    $region5: #{tpu_custom_call.1} parent=1 // pred_fallthru
      _
    // Predicated region
    $region6: #{tpu_custom_call.1} parent=1 // pred_check
      _
    $region7: #{tpu_custom_call.1} parent=1 // pred_check_branch
      %12 = sbr.rel (0) target = $region9
    $region8: #{tpu_custom_call.1} parent=1 // pred_region
      _
    $region9: #{tpu_custom_call.1} parent=1 // pred_fallthru
      _
    // Predicated region
    $region10: #{tpu_custom_call.1} parent=1 // pred_check
      _
    $region11: #{tpu_custom_call.1} parent=1 // pred_check_branch
      %14 = sbr.rel (0) target = $region13
    $region12: #{tpu_custom_call.1} parent=1 // pred_region
      _
    $region13: #{tpu_custom_call.1} parent=1 // pred_fallthru
      _
    %v15 = vld [vmem:[%s0] sm:$0xff]
    %v16 = vld [vmem:[%s1] sm:$0xff]
    %v17 = vld [vmem:[%s1 + $0x8] sm:$0xff]
    %v18 = vld [vmem:[%s1 + $0x10] sm:$0xff]
    %v19 = vld [vmem:[%s1 + $0x18] sm:$0xff]
    %v20 = vld [vmem:[%s2] sm:$0x1]
    %v22 = vlaneseq
    %v23 = vshrl.u32 %v22, 7
    %v24 = vsub.s32 0, %v23
    %v25 = vrot.slane %v20, %v24
    %vm27 = vcmask 261120
    %v29 = vsel %vm27, %v15, 0
    %31 = vmatprep.subr.mxu0 0.0
    %32 = vmatpush1.msra.mxu0 %v16
    %33 = vmatprep.subr.mxu0 0.0
    %34 = vmatpush1.msra.mxu0 %v17
    %35 = vmatprep.subr.mxu0 0.0
    %36 = vmatpush1.msra.mxu0 %v18
    %37 = vmatprep.subr.mxu0 0.0
    %38 = vmatpush1.msra.mxu0 %v19
    %39 = vmatprep.subr.mxu0 0.0
    %40 = vmatpush1.msra.mxu0 0.0
    %41 = vmatprep.subr.mxu0 0.0
    %42 = vmatpush1.msra.mxu0 0.0
    %43 = vmatprep.subr.mxu0 0.0
    %44 = vmatpush1.msra.mxu0 0.0
    %45 = vmatprep.subr.mxu0 0.0
    %46 = vmatpush1.msra.mxu0 0.0
    %47 = vmatprep.subr.mxu0 0.0
    %48 = vmatpush1.msra.mxu0 0.0
    %49 = vmatprep.subr.mxu0 0.0
    %50 = vmatpush1.msra.mxu0 0.0
    %51 = vmatprep.subr.mxu0 0.0
    %52 = vmatpush1.msra.mxu0 0.0
    %53 = vmatprep.subr.mxu0 0.0
    %54 = vmatpush1.msra.mxu0 0.0
    %55 = vmatprep.subr.mxu0 0.0
    %56 = vmatpush1.msra.mxu0 0.0
    %57 = vmatprep.subr.mxu0 0.0
    %58 = vmatpush1.msra.mxu0 0.0
    %59 = vmatprep.subr.mxu0 0.0
    %60 = vmatpush1.msra.mxu0 0.0
    %61 = vmatprep.subr.mxu0 0.0
    %62 = vmatpush1.msra.mxu0 0.0
    %63 = vmatprep.subr.mxu0 0.0
    %64 = vmatpush1.msra.mxu0 0.0
    %65 = vmatprep.subr.mxu0 0.0
    %66 = vmatpush1.msra.mxu0 0.0
    %67 = vmatprep.subr.mxu0 0.0
    %68 = vmatpush1.msra.mxu0 0.0
    %69 = vmatprep.subr.mxu0 0.0
    %70 = vmatpush1.msra.mxu0 0.0
    %71 = vmatprep.subr.mxu0 0.0
    %72 = vmatpush1.msra.mxu0 0.0
    %73 = vmatprep.subr.mxu0 0.0
    %74 = vmatpush1.msra.mxu0 0.0
    %75 = vmatprep.subr.mxu0 0.0
    %76 = vmatpush1.msra.mxu0 0.0
    %77 = vmatprep.subr.mxu0 0.0
    %78 = vmatpush1.msra.mxu0 0.0
    %79 = vmatprep.subr.mxu0 0.0
    %80 = vmatpush1.msra.mxu0 0.0
    %81 = vmatprep.subr.mxu0 0.0
    %82 = vmatpush1.msra.mxu0 0.0
    %83 = vmatprep.subr.mxu0 0.0
    %84 = vmatpush1.msra.mxu0 0.0
    %85 = vmatprep.subr.mxu0 0.0
    %86 = vmatpush1.msra.mxu0 0.0
    %87 = vmatprep.subr.mxu0 0.0
    %88 = vmatpush1.msra.mxu0 0.0
    %89 = vmatprep.subr.mxu0 0.0
    %90 = vmatpush1.msra.mxu0 0.0
    %91 = vmatprep.subr.mxu0 0.0
    %92 = vmatpush1.msra.mxu0 0.0
    %93 = vmatprep.subr.mxu0 0.0
    %94 = vmatpush1.msra.mxu0 0.0
    %95 = vmatprep.mubr.f32.mxu0 0.0
    %96 = vmatmul.mubr.f32.gmra.mrb[0].mxu0 %v29
    %v97 = vpop.f32.mrb[0].mxu0
    %v98 = vadd.f32 %v25, %v97
    %v99 = vpop.f32.mrb[0].mxu0
    %100 = vdwg.mxu0
    %vm101 = vcmask 130048
    %102 = vst.msk [vmem:[#allocation2] sm:$0xff] %vm101, %v98
    // Predicated region
    $region14: #{tpu_custom_call.1} parent=1 // pred_check
      _
    $region15: #{tpu_custom_call.1} parent=1 // pred_check_branch
      %104 = sbr.rel (0) target = $region17
    $region16: #{tpu_custom_call.1} parent=1 // pred_region
      %s106 = ssub.s32 128, 128
      %107 = vsyncadd [#allocation3], %s106
      %s109 = sshll.u32 [#allocation2], 4
      %s110 = int_to_ptr.vmem [resolvable:$true] %s109
      %112 = dma.vmem_to_hbm [thread:$0]  %s110, 128, %s3, [#allocation3]
    $region17: #{tpu_custom_call.1} parent=1 // pred_fallthru
      _
    // Predicated region
    $region18: #{tpu_custom_call.1} parent=1 // pred_check
      _
    $region19: #{tpu_custom_call.1} parent=1 // pred_check_branch
      %114 = sbr.rel (0) target = $region21
    $region20: #{tpu_custom_call.1} parent=1 // pred_region
      %115 = dma.done [#allocation3], 128
    $region21: #{tpu_custom_call.1} parent=1 // pred_fallthru
      _
    %116 = vsyncpa [#allocation3], 1

</llo_original>
